<compile_context>
chip_gen: v5e
topology: v5e:2x2
jax: 0.10.0
libtpu: 0.0.40
codegen_flags: <defaults>
</compile_context>

<pallas_src>
import functools

import jax
import jax.numpy as jnp
from jax.experimental import pallas as pl
from jax.experimental.pallas import tpu as pltpu


# -----------------------------------------------------------------------------
# Hardware probe (heuristic; both branches are functionally correct on any chip)
# -----------------------------------------------------------------------------
@functools.lru_cache(maxsize=None)
def _num_tensorcores():
    """Best-effort TensorCores-per-device: 2 on v7x, 1 on v5e/v6e."""
    try:
        kind = str(getattr(jax.devices()[0], "device_kind", "")).lower()
        if "v7" in kind or "tpu7" in kind:
            return 2
    except Exception:
        pass
    return 1


# -----------------------------------------------------------------------------
# In-kernel compute: feature-major MLP
#   x:  (d_in, n)   activations, batch on lanes
#   wK: (out, in)   PyTorch-native Linear weight layout
#   bK: (out, 1)    bias as a column, broadcast along lanes
# -----------------------------------------------------------------------------
def _mlp_fm(x, w1, b1, w2, b2, w3, b3):
    cdt = w1.dtype  # MXU operand dtype (f32 or bf16); accumulation always f32
    h = jnp.dot(w1, x.astype(cdt), preferred_element_type=jnp.float32) + b1
    h = jnp.maximum(h, 0.0)
    h = jnp.dot(w2, h.astype(cdt), preferred_element_type=jnp.float32) + b2
    h = jnp.maximum(h, 0.0)
    return jnp.dot(w3, h.astype(cdt), preferred_element_type=jnp.float32) + b3


def _mlp_kernel(x_ref, w1_ref, b1_ref, w2_ref, b2_ref, w3_ref, b3_ref, o_ref):
    y = _mlp_fm(x_ref[...], w1_ref[...], b1_ref[...], w2_ref[...], b2_ref[...],
                w3_ref[...], b3_ref[...])
    o_ref[...] = y.astype(o_ref.dtype)


def _make_euler_kernel(num_steps, dt):
    """x_{n+1} = x_n + dt * net(x_n); the whole time loop is fused in-kernel."""
    num_steps = int(num_steps)
    dt = float(dt)
    unroll = True if num_steps <= 32 else 4  # full unroll for short fixed trip counts

    def kernel(x_ref, w1_ref, b1_ref, w2_ref, b2_ref, w3_ref, b3_ref, o_ref):
        tb = x_ref.shape[-1]  # static block width
        w1 = w1_ref[...]; w2 = w2_ref[...]; w3 = w3_ref[...]
        cdt = w1.dtype
        # Hoist bias lane-broadcasts out of the time loop (JAX does not CSE them).
        b1 = jnp.broadcast_to(b1_ref[...], (w1.shape[0], tb))
        b2 = jnp.broadcast_to(b2_ref[...], (w2.shape[0], tb))
        b3 = jnp.broadcast_to(b3_ref[...], (w3.shape[0], tb))
        x0 = x_ref[...].astype(jnp.float32)

        def step(_, x):
            h = jnp.maximum(
                jnp.dot(w1, x.astype(cdt), preferred_element_type=jnp.float32) + b1, 0.0)
            h = jnp.maximum(
                jnp.dot(w2, h.astype(cdt), preferred_element_type=jnp.float32) + b2, 0.0)
            dx = jnp.dot(w3, h.astype(cdt), preferred_element_type=jnp.float32) + b3
            return x + dt * dx

        x_final = jax.lax.fori_loop(0, num_steps, step, x0, unroll=unroll)
        o_ref[...] = x_final.astype(o_ref.dtype)

    return kernel


# -----------------------------------------------------------------------------
# Tiling & pallas_call plumbing
# -----------------------------------------------------------------------------
def _choose_batch_tile(B, *, euler, requested=None):
    """Lane-aligned batch tile.

    Forward path: as fat as possible (per-step overhead dominates at d=6); only on
    v7x do we keep >= 4 grid steps so the two TensorCores each pipeline >= 2 steps.
    Euler path: capped at 256 lanes so loop-carried state + intermediates + hoisted
    biases fit the 64-vreg file (launch overhead is amortized over num_steps anyway).
    `requested`, if given, should be a multiple of 128 or >= B.
    """
    if requested is not None:
        return min(int(requested), B)
    if euler:
        return B if B <= 256 else 256
    if B <= 128:
        return B
    lane_groups = pl.cdiv(B, 128)
    if _num_tensorcores() >= 2:
        per_step = max(1, min(64, lane_groups // 4))  # >= 4 steps -> >= 2 per TC
    else:
        per_step = min(lane_groups, 64)               # one big tile (<= 8192 lanes)
    tb = per_step * 128
    return B if tb >= B else tb


def _pallas_mlp_call(kernel, x_fm, params, out_dtype, tb):
    d_in, B = x_fm.shape
    w1, b1, w2, b2, w3, b3 = params
    H = w1.shape[0]
    d_out = w3.shape[0]
    grid = (pl.cdiv(B, tb),)
    const = lambda i: (0, 0)  # weights/biases: same block every step -> VMEM-resident

    return pl.pallas_call(
        kernel,
        out_shape=jax.ShapeDtypeStruct((d_out, B), out_dtype),
        grid=grid,
        in_specs=[
            pl.BlockSpec((d_in, tb), lambda i: (0, i)),   # x tile: lane-dense batch
            pl.BlockSpec((H, d_in), const),               # w1 (PyTorch (out, in))
            pl.BlockSpec((H, 1), const),                  # b1
            pl.BlockSpec((H, H), const),                  # w2
            pl.BlockSpec((H, 1), const),                  # b2
            pl.BlockSpec((d_out, H), const),              # w3
            pl.BlockSpec((d_out, 1), const),              # b3
        ],
        out_specs=pl.BlockSpec((d_out, tb), lambda i: (0, i)),  # lane-dense store
        compiler_params=pltpu.CompilerParams(
            dimension_semantics=("parallel",),  # batch tiles shard across v7x's 2 TCs
        ),
    )(x_fm, w1, b1, w2, b2, w3, b3)


def _maybe_cast_weights(params, weight_dtype):
    w1, b1, w2, b2, w3, b3 = params
    if weight_dtype is not None:
        w1, w2, w3 = (w.astype(weight_dtype) for w in (w1, w2, w3))
    return (w1, b1, w2, b2, w3, b3)


# -----------------------------------------------------------------------------
# Feature-major entry points (preferred: no wrapper transposes at all)
# -----------------------------------------------------------------------------
def ode_dynamics_forward_fm(t, x_fm, params, *, batch_tile=None, weight_dtype=None):
    """net(x) with feature-major x: (d, B) -> (d, B). `t` ignored (as in PyTorch)."""
    del t
    params = _maybe_cast_weights(params, weight_dtype)
    _, B = x_fm.shape
    tb = _choose_batch_tile(B, euler=False, requested=batch_tile)
    return _pallas_mlp_call(_mlp_kernel, x_fm, params, x_fm.dtype, tb)


def ode_dynamics_integrate_fm(x0_fm, params, *, dt, num_steps,
                              batch_tile=None, weight_dtype=None):
    """Fused explicit-Euler rollout, feature-major (d, B) -> (d, B), one pallas_call."""
    params = _maybe_cast_weights(params, weight_dtype)
    d, B = x0_fm.shape
    assert params[4].shape[0] == d, "dynamics must map the state space to itself"
    tb = _choose_batch_tile(B, euler=True, requested=batch_tile)
    kernel = _make_euler_kernel(num_steps, dt)
    return _pallas_mlp_call(kernel, x0_fm, params, x0_fm.dtype, tb)


# -----------------------------------------------------------------------------
# Batch-major wrappers (drop-in ODEDynamicsModel.forward semantics)
# -----------------------------------------------------------------------------
def ode_dynamics_forward(t, input_state, params, *, batch_tile=None, weight_dtype=None):
    """Pallas equivalent of ODEDynamicsModel.forward(t, input_state); `t` ignored."""
    out_fm = ode_dynamics_forward_fm(t, input_state.T, params,
                                     batch_tile=batch_tile, weight_dtype=weight_dtype)
    return out_fm.T


def ode_dynamics_integrate(x0, params, *, dt, num_steps,
                           batch_tile=None, weight_dtype=None):
    out_fm = ode_dynamics_integrate_fm(x0.T, params, dt=dt, num_steps=num_steps,
                                       batch_tile=batch_tile, weight_dtype=weight_dtype)
    return out_fm.T


# -----------------------------------------------------------------------------
# Parameter init (mimics torch.nn.Linear U(-1/sqrt(fan_in), +)), PyTorch layout
# -----------------------------------------------------------------------------
def init_params(key, d_in, hidden, d_out, dtype=jnp.float32):
    keys = jax.random.split(key, 6)

    def linear(kw, kb, fan_in, fan_out):
        bound = fan_in ** -0.5
        w = jax.random.uniform(kw, (fan_out, fan_in), dtype, -bound, bound)
        b = jax.random.uniform(kb, (fan_out, 1), dtype, -bound, bound)
        return w, b

    w1, b1 = linear(keys[0], keys[1], d_in, hidden)
    w2, b2 = linear(keys[2], keys[3], hidden, hidden)
    w3, b3 = linear(keys[4], keys[5], hidden, d_out)
    return (w1, b1, w2, b2, w3, b3)


# -----------------------------------------------------------------------------
# Pure-JAX references
# -----------------------------------------------------------------------------
def reference_forward(x, params):
    w1, b1, w2, b2, w3, b3 = params
    hp = jax.lax.Precision.HIGHEST
    h = jnp.maximum(jnp.dot(x, w1.T, precision=hp) + b1[:, 0], 0.0)
    h = jnp.maximum(jnp.dot(h, w2.T, precision=hp) + b2[:, 0], 0.0)
    return jnp.dot(h, w3.T, precision=hp) + b3[:, 0]


def reference_integrate(x, params, dt, num_steps):
    for _ in range(num_steps):
        x = x + dt * reference_forward(x, params)
    return x


if __name__ == "__main__":
    # state_dim=4, action_dim=2 -> feature dim = 6 ; hidden_layer=1, H=32
    # batch=256 exercises lane-aligned tiles; an explicit 128-tile run exercises
    # a multi-step grid + ragged last block.
    state_dim, action_dim = 4, 2
    hidden = 32
    batch = 256
    d_io = state_dim + action_dim

    key = jax.random.PRNGKey(0)
    k_param, k_x = jax.random.split(key)

    params = init_params(k_param, d_io, hidden, d_io)
    input_state = jax.random.normal(k_x, (batch, d_io), jnp.float32)
    t = jnp.float32(0.0)  # ignored, as in the PyTorch module
    ref = reference_forward(input_state, params)

    # 1) batch-major forward (PyTorch semantics), f32 weights
    out = jax.block_until_ready(ode_dynamics_forward(t, input_state, params))
    assert out.shape == (batch, d_io)
    assert jnp.allclose(out, ref, atol=1e-4, rtol=1e-4)

    # 2) feature-major forward (no wrapper transposes)
    out_fm = jax.block_until_ready(
        ode_dynamics_forward_fm(t, input_state.T, params))
    assert out_fm.shape == (d_io, batch)
    assert jnp.allclose(out_fm, ref.T, atol=1e-4, rtol=1e-4)

    # 3) multi-step grid with a ragged last block (B=200, explicit 128-lane tiles)
    x_ragged = jax.random.normal(jax.random.PRNGKey(1), (200, d_io), jnp.float32)
    out_r = jax.block_until_ready(
        ode_dynamics_forward(t, x_ragged, params, batch_tile=128))
    assert jnp.allclose(out_r, reference_forward(x_ragged, params),
                        atol=1e-4, rtol=1e-4)

    # 4) optional bf16 weight path (forward only; loose tolerance)
    out_bf16 = jax.block_until_ready(
        ode_dynamics_forward(t, input_state, params, weight_dtype=jnp.bfloat16))
    assert jnp.allclose(out_bf16, ref, atol=1e-1, rtol=1e-1)

    # 5) fused explicit-Euler rollout: whole time loop inside one pallas_call
    dt, num_steps = 0.01, 16
    x_final = jax.block_until_ready(
        ode_dynamics_integrate(input_state, params, dt=dt, num_steps=num_steps))
    x_final_ref = reference_integrate(input_state, params, dt, num_steps)
    assert x_final.shape == (batch, d_io)
    assert jnp.allclose(x_final, x_final_ref, atol=1e-4, rtol=1e-4)

    print("KERNEL_OK")
</pallas_src>

<mosaic_0001>
module attributes {stable_mosaic.version = 11 : i64} {
  func.func @_mlp_kernel(%arg0: i32, %arg1: memref<6x256xf32, #tpu.memory_space<vmem>>, %arg2: memref<32x6xf32, #tpu.memory_space<vmem>>, %arg3: memref<32x1xf32, #tpu.memory_space<vmem>>, %arg4: memref<32x32xf32, #tpu.memory_space<vmem>>, %arg5: memref<32x1xf32, #tpu.memory_space<vmem>>, %arg6: memref<6x32xf32, #tpu.memory_space<vmem>>, %arg7: memref<6x1xf32, #tpu.memory_space<vmem>>, %arg8: memref<6x256xf32, #tpu.memory_space<vmem>>) attributes {dimension_semantics = [#tpu.dimension_semantics<parallel>], iteration_bounds = array<i64: 1>, scalar_prefetch = 0 : i64, scratch_operands = 0 : i64, tpu.core_type = #tpu.core_type<tc>, window_params = [{transform_indices = @transform_0, window_bounds = array<i64: 6, 256>}, {pipeline_mode = #tpu.pipeline_mode<synchronous>, transform_indices = @transform_1, window_bounds = array<i64: 32, 6>}, {pipeline_mode = #tpu.pipeline_mode<synchronous>, transform_indices = @transform_2, window_bounds = array<i64: 32, 1>}, {pipeline_mode = #tpu.pipeline_mode<synchronous>, transform_indices = @transform_3, window_bounds = array<i64: 32, 32>}, {pipeline_mode = #tpu.pipeline_mode<synchronous>, transform_indices = @transform_4, window_bounds = array<i64: 32, 1>}, {pipeline_mode = #tpu.pipeline_mode<synchronous>, transform_indices = @transform_5, window_bounds = array<i64: 6, 32>}, {pipeline_mode = #tpu.pipeline_mode<synchronous>, transform_indices = @transform_6, window_bounds = array<i64: 6, 1>}, {transform_indices = @transform_7, window_bounds = array<i64: 6, 256>}]} {
    %c0 = arith.constant 0 : index
    %c0_0 = arith.constant 0 : index
    %0 = vector.load %arg1[%c0, %c0_0] : memref<6x256xf32, #tpu.memory_space<vmem>>, vector<6x256xf32>
    %c0_1 = arith.constant 0 : index
    %c0_2 = arith.constant 0 : index
    %1 = vector.load %arg2[%c0_1, %c0_2] : memref<32x6xf32, #tpu.memory_space<vmem>>, vector<32x6xf32>
    %c0_3 = arith.constant 0 : index
    %c0_4 = arith.constant 0 : index
    %2 = vector.load %arg3[%c0_3, %c0_4] : memref<32x1xf32, #tpu.memory_space<vmem>>, vector<32x1xf32>
    %c0_5 = arith.constant 0 : index
    %c0_6 = arith.constant 0 : index
    %3 = vector.load %arg4[%c0_5, %c0_6] : memref<32x32xf32, #tpu.memory_space<vmem>>, vector<32x32xf32>
    %c0_7 = arith.constant 0 : index
    %c0_8 = arith.constant 0 : index
    %4 = vector.load %arg5[%c0_7, %c0_8] : memref<32x1xf32, #tpu.memory_space<vmem>>, vector<32x1xf32>
    %c0_9 = arith.constant 0 : index
    %c0_10 = arith.constant 0 : index
    %5 = vector.load %arg6[%c0_9, %c0_10] : memref<6x32xf32, #tpu.memory_space<vmem>>, vector<6x32xf32>
    %c0_11 = arith.constant 0 : index
    %c0_12 = arith.constant 0 : index
    %6 = vector.load %arg7[%c0_11, %c0_12] : memref<6x1xf32, #tpu.memory_space<vmem>>, vector<6x1xf32>
    %cst = arith.constant dense<0.000000e+00> : vector<32x256xf32>
    %7 = tpu.matmul %1, %0, %cst {dimension_numbers = #tpu.dot_dimension_numbers<[1], [0], [0], [1], [0, 0, 1, 1], [], []>} : vector<32x6xf32>, vector<6x256xf32>, vector<32x256xf32> -> vector<32x256xf32>
    %8 = vector.broadcast %2 : vector<32x1xf32> to vector<32x256xf32>
    %9 = arith.addf %7, %8 : vector<32x256xf32>
    %cst_13 = arith.constant 0.000000e+00 : f32
    %10 = vector.broadcast %cst_13 : f32 to vector<32x256xf32>
    %11 = arith.maximumf %9, %10 : vector<32x256xf32>
    %cst_14 = arith.constant dense<0.000000e+00> : vector<32x256xf32>
    %12 = tpu.matmul %3, %11, %cst_14 {dimension_numbers = #tpu.dot_dimension_numbers<[1], [0], [0], [1], [0, 0, 1, 1], [], []>} : vector<32x32xf32>, vector<32x256xf32>, vector<32x256xf32> -> vector<32x256xf32>
    %13 = vector.broadcast %4 : vector<32x1xf32> to vector<32x256xf32>
    %14 = arith.addf %12, %13 : vector<32x256xf32>
    %cst_15 = arith.constant 0.000000e+00 : f32
    %15 = vector.broadcast %cst_15 : f32 to vector<32x256xf32>
    %16 = arith.maximumf %14, %15 : vector<32x256xf32>
    %cst_16 = arith.constant dense<0.000000e+00> : vector<6x256xf32>
    %17 = tpu.matmul %5, %16, %cst_16 {dimension_numbers = #tpu.dot_dimension_numbers<[1], [0], [0], [1], [0, 0, 1, 1], [], []>} : vector<6x32xf32>, vector<32x256xf32>, vector<6x256xf32> -> vector<6x256xf32>
    %18 = vector.broadcast %6 : vector<6x1xf32> to vector<6x256xf32>
    %19 = arith.addf %17, %18 : vector<6x256xf32>
    %c0_17 = arith.constant 0 : index
    %c0_18 = arith.constant 0 : index
    %20 = vector.load %arg8[%c0_17, %c0_18] : memref<6x256xf32, #tpu.memory_space<vmem>>, vector<6x256xf32>
    tpu.vector_store %arg8[%c0_17, %c0_18], %19 {strides = array<i32>} : memref<6x256xf32, #tpu.memory_space<vmem>>, vector<6x256xf32>,
    return
  }
  func.func @transform_0(%arg0: i32) -> (i32, i32) {
    %c0_i32 = arith.constant 0 : i32
    %c0_i32_0 = arith.constant 0 : i32
    return %c0_i32, %arg0 : i32, i32
  }
  func.func @transform_1(%arg0: i32) -> (i32, i32) {
    %c0_i32 = arith.constant 0 : i32
    %c0_i32_0 = arith.constant 0 : i32
    %c0_i32_1 = arith.constant 0 : i32
    return %c0_i32, %c0_i32_0 : i32, i32
  }
  func.func @transform_2(%arg0: i32) -> (i32, i32) {
    %c0_i32 = arith.constant 0 : i32
    %c0_i32_0 = arith.constant 0 : i32
    %c0_i32_1 = arith.constant 0 : i32
    return %c0_i32, %c0_i32_0 : i32, i32
  }
  func.func @transform_3(%arg0: i32) -> (i32, i32) {
    %c0_i32 = arith.constant 0 : i32
    %c0_i32_0 = arith.constant 0 : i32
    %c0_i32_1 = arith.constant 0 : i32
    return %c0_i32, %c0_i32_0 : i32, i32
  }
  func.func @transform_4(%arg0: i32) -> (i32, i32) {
    %c0_i32 = arith.constant 0 : i32
    %c0_i32_0 = arith.constant 0 : i32
    %c0_i32_1 = arith.constant 0 : i32
    return %c0_i32, %c0_i32_0 : i32, i32
  }
  func.func @transform_5(%arg0: i32) -> (i32, i32) {
    %c0_i32 = arith.constant 0 : i32
    %c0_i32_0 = arith.constant 0 : i32
    %c0_i32_1 = arith.constant 0 : i32
    return %c0_i32, %c0_i32_0 : i32, i32
  }
  func.func @transform_6(%arg0: i32) -> (i32, i32) {
    %c0_i32 = arith.constant 0 : i32
    %c0_i32_0 = arith.constant 0 : i32
    %c0_i32_1 = arith.constant 0 : i32
    return %c0_i32, %c0_i32_0 : i32, i32
  }
  func.func @transform_7(%arg0: i32) -> (i32, i32) {
    %c0_i32 = arith.constant 0 : i32
    %c0_i32_0 = arith.constant 0 : i32
    return %c0_i32, %arg0 : i32, i32
  }
}

</mosaic_0001>

<llo_original>
// kernel: tpu_custom_call.1
$region0: #{tpu_custom_call.1}
  #allocation0 [shape = 'u32[]', space=smem, size = 0x4, offset = 0x4, fixed_abs, tag = 'smem constant byte address 0x4 - core index']
  #allocation1 [shape = 'u32[72,128]{1,0:T(1,128)}', space=vmem, size = 0x9000, scoped, tag = 'internal scratch']
  %s0 = inlined_call_operand.vmem [shape: f32[6,256], index: 0, kind: input, shape index: {}]
  %s1 = inlined_call_operand.vmem [shape: f32[32,6], index: 1, kind: input, shape index: {}]
  %s2 = inlined_call_operand.vmem [shape: f32[32,1], index: 2, kind: input, shape index: {}]
  %s3 = inlined_call_operand.vmem [shape: f32[32,32], index: 3, kind: input, shape index: {}]
  %s4 = inlined_call_operand.vmem [shape: f32[32,1], index: 4, kind: input, shape index: {}]
  %s5 = inlined_call_operand.vmem [shape: f32[6,32], index: 5, kind: input, shape index: {}]
  %s6 = inlined_call_operand.vmem [shape: f32[6,1], index: 6, kind: input, shape index: {}]
  %s7 = inlined_call_operand.hbm [shape: f32[6,256], index: 7, kind: output, shape index: {}]
  %s8 = sld [smem:[#allocation0]]
  $region38: #{tpu_custom_call.1} parent=0
    _
  %s10 = ssub.s32 1, %s8
  %s11 = scalar_select 0, %s10, %s8
  $region1: #{tpu_custom_call.1} parent=0
    #allocation2 [shape = 'u8[8192]{0}', space=vmem, size = 0x2000, scoped, tag = 'output window, operand 0, single buffered']
    #allocation3 [shape = 's32[1]{0}', space=sflag, size = 0x4, scoped, tag = 'scoped memory for tpu_custom_call.1']
    %12 = vsyncpa [#allocation3], 0
    // Predicated region
    $region2: #{tpu_custom_call.1} parent=1 // pred_check
      _
    $region3: #{tpu_custom_call.1} parent=1 // pred_check_branch
      %14 = sbr.rel (0) target = $region5
    $region4: #{tpu_custom_call.1} parent=1 // pred_region
      _
    $region5: #{tpu_custom_call.1} parent=1 // pred_fallthru
      _
    // Predicated region
    $region6: #{tpu_custom_call.1} parent=1 // pred_check
      _
    $region7: #{tpu_custom_call.1} parent=1 // pred_check_branch
      %16 = sbr.rel (0) target = $region9
    $region8: #{tpu_custom_call.1} parent=1 // pred_region
      _
    $region9: #{tpu_custom_call.1} parent=1 // pred_fallthru
      _
    // Predicated region
    $region10: #{tpu_custom_call.1} parent=1 // pred_check
      _
    $region11: #{tpu_custom_call.1} parent=1 // pred_check_branch
      %18 = sbr.rel (0) target = $region13
    $region12: #{tpu_custom_call.1} parent=1 // pred_region
      _
    $region13: #{tpu_custom_call.1} parent=1 // pred_fallthru
      _
    // Predicated region
    $region14: #{tpu_custom_call.1} parent=1 // pred_check
      _
    $region15: #{tpu_custom_call.1} parent=1 // pred_check_branch
      %20 = sbr.rel (0) target = $region17
    $region16: #{tpu_custom_call.1} parent=1 // pred_region
      _
    $region17: #{tpu_custom_call.1} parent=1 // pred_fallthru
      _
    // Predicated region
    $region18: #{tpu_custom_call.1} parent=1 // pred_check
      _
    $region19: #{tpu_custom_call.1} parent=1 // pred_check_branch
      %22 = sbr.rel (0) target = $region21
    $region20: #{tpu_custom_call.1} parent=1 // pred_region
      _
    $region21: #{tpu_custom_call.1} parent=1 // pred_fallthru
      _
    // Predicated region
    $region22: #{tpu_custom_call.1} parent=1 // pred_check
      _
    $region23: #{tpu_custom_call.1} parent=1 // pred_check_branch
      %24 = sbr.rel (0) target = $region25
    $region24: #{tpu_custom_call.1} parent=1 // pred_region
      _
    $region25: #{tpu_custom_call.1} parent=1 // pred_fallthru
      _
    // Predicated region
    $region26: #{tpu_custom_call.1} parent=1 // pred_check
      _
    $region27: #{tpu_custom_call.1} parent=1 // pred_check_branch
      %26 = sbr.rel (0) target = $region29
    $region28: #{tpu_custom_call.1} parent=1 // pred_region
      _
    $region29: #{tpu_custom_call.1} parent=1 // pred_fallthru
      _
    %v27 = vld [vmem:[%s0] sm:$0x3f]
    %v28 = vld [vmem:[%s0 + $0x8] sm:$0x3f]
    %v29 = vld [vmem:[%s1] sm:$0xff]
    %v30 = vld [vmem:[%s1 + $0x8] sm:$0xff]
    %v31 = vld [vmem:[%s1 + $0x10] sm:$0xff]
    %v32 = vld [vmem:[%s1 + $0x18] sm:$0xff]
    %v33 = vld [vmem:[%s2] sm:$0xff]
    %v34 = vld [vmem:[%s2 + $0x8] sm:$0xff]
    %v35 = vld [vmem:[%s2 + $0x10] sm:$0xff]
    %v36 = vld [vmem:[%s2 + $0x18] sm:$0xff]
    %v37 = vld [vmem:[%s3] sm:$0xff]
    %v38 = vld [vmem:[%s3 + $0x8] sm:$0xff]
    %v39 = vld [vmem:[%s3 + $0x10] sm:$0xff]
    %v40 = vld [vmem:[%s3 + $0x18] sm:$0xff]
    %v41 = vld [vmem:[%s4] sm:$0xff]
    %v42 = vld [vmem:[%s4 + $0x8] sm:$0xff]
    %v43 = vld [vmem:[%s4 + $0x10] sm:$0xff]
    %v44 = vld [vmem:[%s4 + $0x18] sm:$0xff]
    %v45 = vld [vmem:[%s5] sm:$0x3f]
    %v46 = vld [vmem:[%s6] sm:$0x3f]
    %48 = vset.pattern.permute.xlu0 0
    %49 = vperm.xlu0 %48, %v33
    %v50 = vpop.permute.xlu0 %49
    %53 = vset.pattern.permute.xlu0 0
    %54 = vperm.xlu0 %53, %v34
    %v55 = vpop.permute.xlu0 %54
    %58 = vset.pattern.permute.xlu0 0
    %59 = vperm.xlu0 %58, %v35
    %v60 = vpop.permute.xlu0 %59
    %63 = vset.pattern.permute.xlu0 0
    %64 = vperm.xlu0 %63, %v36
    %v65 = vpop.permute.xlu0 %64
    %vm67 = vcmask 48128
    %v69 = vsel %vm67, %v29, 0
    %v72 = vsel %vm67, %v30, 0
    %v75 = vsel %vm67, %v31, 0
    %v78 = vsel %vm67, %v32, 0
    %vm80 = vcmask 1045504
    %v82 = vsel %vm80, %v27, 0
    %v85 = vsel %vm80, %v28, 0
    %87 = vmatpush.msra.mxu0 0.0
    %88 = vmatpush.msra.mxu0 0.0
    %89 = vmatpush.msra.mxu0 0.0
    %90 = vmatpush.msra.mxu0 0.0
    %91 = vmatpush.msra.mxu0 0.0
    %92 = vmatpush.msra.mxu0 0.0
    %93 = vmatpush.msra.mxu0 0.0
    %94 = vmatpush.msra.mxu0 0.0
    %95 = vmatpush.msra.mxu0 0.0
    %96 = vmatpush.msra.mxu0 0.0
    %97 = vmatpush.msra.mxu0 0.0
    %98 = vmatpush.msra.mxu0 0.0
    %99 = vmatpush.msra.mxu0 0.0
    %100 = vmatpush.msra.mxu0 0.0
    %101 = vmatpush.msra.mxu0 0.0
    %102 = vmatpush.msra.mxu0 %v82
    %103 = vmatmul.f32.gmra.mxu0 %v69
    %v104 = vpop.f32.mrf.mxu0
    %v105 = vadd.f32 %v50, %v104
    %106 = vmatmul.f32.gmra.mxu0 %v72
    %v107 = vpop.f32.mrf.mxu0
    %v108 = vadd.f32 %v55, %v107
    %109 = vmatmul.f32.gmra.mxu0 %v75
    %v110 = vpop.f32.mrf.mxu0
    %v111 = vadd.f32 %v60, %v110
    %112 = vmatmul.f32.gmra.mxu0 %v78
    %v113 = vpop.f32.mrf.mxu0
    %v114 = vadd.f32 %v65, %v113
    %115 = vdwg.mxu0
    %116 = vmatpush.msra.mxu0 0.0
    %117 = vmatpush.msra.mxu0 0.0
    %118 = vmatpush.msra.mxu0 0.0
    %119 = vmatpush.msra.mxu0 0.0
    %120 = vmatpush.msra.mxu0 0.0
    %121 = vmatpush.msra.mxu0 0.0
    %122 = vmatpush.msra.mxu0 0.0
    %123 = vmatpush.msra.mxu0 0.0
    %124 = vmatpush.msra.mxu0 0.0
    %125 = vmatpush.msra.mxu0 0.0
    %126 = vmatpush.msra.mxu0 0.0
    %127 = vmatpush.msra.mxu0 0.0
    %128 = vmatpush.msra.mxu0 0.0
    %129 = vmatpush.msra.mxu0 0.0
    %130 = vmatpush.msra.mxu0 0.0
    %131 = vmatpush.msra.mxu0 %v85
    %132 = vmatmul.f32.gmra.mxu0 %v69
    %v133 = vpop.f32.mrf.mxu0
    %v134 = vadd.f32 %v50, %v133
    %135 = vmatmul.f32.gmra.mxu0 %v72
    %v136 = vpop.f32.mrf.mxu0
    %v137 = vadd.f32 %v55, %v136
    %138 = vmatmul.f32.gmra.mxu0 %v75
    %v139 = vpop.f32.mrf.mxu0
    %v140 = vadd.f32 %v60, %v139
    %141 = vmatmul.f32.gmra.mxu0 %v78
    %v142 = vpop.f32.mrf.mxu0
    %v143 = vadd.f32 %v65, %v142
    %144 = vdwg.mxu0
    %v145 = vmax.f32 %v105, 0.0
    %v146 = vmax.f32 %v134, 0.0
    %v147 = vmax.f32 %v108, 0.0
    %v148 = vmax.f32 %v137, 0.0
    %v149 = vmax.f32 %v111, 0.0
    %v150 = vmax.f32 %v140, 0.0
    %v151 = vmax.f32 %v114, 0.0
    %v152 = vmax.f32 %v143, 0.0
    %154 = vset.pattern.permute.xlu0 0
    %155 = vperm.xlu0 %154, %v41
    %v156 = vpop.permute.xlu0 %155
    %159 = vset.pattern.permute.xlu0 0
    %160 = vperm.xlu0 %159, %v42
    %v161 = vpop.permute.xlu0 %160
    %164 = vset.pattern.permute.xlu0 0
    %165 = vperm.xlu0 %164, %v43
    %v166 = vpop.permute.xlu0 %165
    %169 = vset.pattern.permute.xlu0 0
    %170 = vperm.xlu0 %169, %v44
    %v171 = vpop.permute.xlu0 %170
    %vm173 = vcmask 261120
    %v175 = vsel %vm173, %v37, 0
    %v178 = vsel %vm173, %v38, 0
    %v181 = vsel %vm173, %v39, 0
    %v184 = vsel %vm173, %v40, 0
    %186 = vmatpush.msra.mxu0 0.0
    %187 = vmatpush.msra.mxu0 0.0
    %188 = vmatpush.msra.mxu0 0.0
    %189 = vmatpush.msra.mxu0 0.0
    %190 = vmatpush.msra.mxu0 0.0
    %191 = vmatpush.msra.mxu0 0.0
    %192 = vmatpush.msra.mxu0 0.0
    %193 = vmatpush.msra.mxu0 0.0
    %194 = vmatpush.msra.mxu0 0.0
    %195 = vmatpush.msra.mxu0 0.0
    %196 = vmatpush.msra.mxu0 0.0
    %197 = vmatpush.msra.mxu0 0.0
    %198 = vmatpush.msra.mxu0 %v151
    %199 = vmatpush.msra.mxu0 %v149
    %200 = vmatpush.msra.mxu0 %v147
    %201 = vmatpush.msra.mxu0 %v145
    %202 = vmatmul.f32.gmra.mxu0 %v175
    %v203 = vpop.f32.mrf.mxu0
    %v204 = vadd.f32 %v156, %v203
    %205 = vmatmul.f32.gmra.mxu0 %v178
    %v206 = vpop.f32.mrf.mxu0
    %v207 = vadd.f32 %v161, %v206
    %208 = vmatmul.f32.gmra.mxu0 %v181
    %v209 = vpop.f32.mrf.mxu0
    %v210 = vadd.f32 %v166, %v209
    %211 = vmatmul.f32.gmra.mxu0 %v184
    %v212 = vpop.f32.mrf.mxu0
    %v213 = vadd.f32 %v171, %v212
    %214 = vdwg.mxu0
    %215 = vmatpush.msra.mxu0 0.0
    %216 = vmatpush.msra.mxu0 0.0
    %217 = vmatpush.msra.mxu0 0.0
    %218 = vmatpush.msra.mxu0 0.0
    %219 = vmatpush.msra.mxu0 0.0
    %220 = vmatpush.msra.mxu0 0.0
    %221 = vmatpush.msra.mxu0 0.0
    %222 = vmatpush.msra.mxu0 0.0
    %223 = vmatpush.msra.mxu0 0.0
    %224 = vmatpush.msra.mxu0 0.0
    %225 = vmatpush.msra.mxu0 0.0
    %226 = vmatpush.msra.mxu0 0.0
    %227 = vmatpush.msra.mxu0 %v152
    %228 = vmatpush.msra.mxu0 %v150
    %229 = vmatpush.msra.mxu0 %v148
    %230 = vmatpush.msra.mxu0 %v146
    %231 = vmatmul.f32.gmra.mxu0 %v175
    %v232 = vpop.f32.mrf.mxu0
    %v233 = vadd.f32 %v156, %v232
    %234 = vmatmul.f32.gmra.mxu0 %v178
    %v235 = vpop.f32.mrf.mxu0
    %v236 = vadd.f32 %v161, %v235
    %237 = vmatmul.f32.gmra.mxu0 %v181
    %v238 = vpop.f32.mrf.mxu0
    %v239 = vadd.f32 %v166, %v238
    %240 = vmatmul.f32.gmra.mxu0 %v184
    %v241 = vpop.f32.mrf.mxu0
    %v242 = vadd.f32 %v171, %v241
    %243 = vdwg.mxu0
    %v244 = vmax.f32 %v204, 0.0
    %v245 = vmax.f32 %v233, 0.0
    %v246 = vmax.f32 %v207, 0.0
    %v247 = vmax.f32 %v236, 0.0
    %v248 = vmax.f32 %v210, 0.0
    %v249 = vmax.f32 %v239, 0.0
    %v250 = vmax.f32 %v213, 0.0
    %v251 = vmax.f32 %v242, 0.0
    %253 = vset.pattern.permute.xlu0 0
    %254 = vperm.xlu0 %253, %v46
    %v255 = vpop.permute.xlu0 %254
    %v258 = vsel %vm173, %v45, 0
    %260 = vmatpush.msra.mxu0 0.0
    %261 = vmatpush.msra.mxu0 0.0
    %262 = vmatpush.msra.mxu0 0.0
    %263 = vmatpush.msra.mxu0 0.0
    %264 = vmatpush.msra.mxu0 0.0
    %265 = vmatpush.msra.mxu0 0.0
    %266 = vmatpush.msra.mxu0 0.0
    %267 = vmatpush.msra.mxu0 0.0
    %268 = vmatpush.msra.mxu0 0.0
    %269 = vmatpush.msra.mxu0 0.0
    %270 = vmatpush.msra.mxu0 0.0
    %271 = vmatpush.msra.mxu0 0.0
    %272 = vmatpush.msra.mxu0 %v250
    %273 = vmatpush.msra.mxu0 %v248
    %274 = vmatpush.msra.mxu0 %v246
    %275 = vmatpush.msra.mxu0 %v244
    %276 = vmatmul.f32.gmra.mxu0 %v258
    %v277 = vpop.f32.mrf.mxu0
    %v278 = vadd.f32 %v255, %v277
    %279 = vdwg.mxu0
    %280 = vmatpush.msra.mxu0 0.0
    %281 = vmatpush.msra.mxu0 0.0
    %282 = vmatpush.msra.mxu0 0.0
    %283 = vmatpush.msra.mxu0 0.0
    %284 = vmatpush.msra.mxu0 0.0
    %285 = vmatpush.msra.mxu0 0.0
    %286 = vmatpush.msra.mxu0 0.0
    %287 = vmatpush.msra.mxu0 0.0
    %288 = vmatpush.msra.mxu0 0.0
    %289 = vmatpush.msra.mxu0 0.0
    %290 = vmatpush.msra.mxu0 0.0
    %291 = vmatpush.msra.mxu0 0.0
    %292 = vmatpush.msra.mxu0 %v251
    %293 = vmatpush.msra.mxu0 %v249
    %294 = vmatpush.msra.mxu0 %v247
    %295 = vmatpush.msra.mxu0 %v245
    %296 = vmatmul.f32.gmra.mxu0 %v258
    %v297 = vpop.f32.mrf.mxu0
    %v298 = vadd.f32 %v255, %v297
    %299 = vdwg.mxu0
    %300 = vst [vmem:[#allocation2] sm:$0x3f] %v278
    %301 = vst [vmem:[#allocation2 + $0x8] sm:$0x3f] %v298
    // Predicated region
    $region30: #{tpu_custom_call.1} parent=1 // pred_check
      _
    $region31: #{tpu_custom_call.1} parent=1 // pred_check_branch
      %303 = sbr.rel (0) target = $region33
    $region32: #{tpu_custom_call.1} parent=1 // pred_region
      %305 = vsyncadd [#allocation3], 0
      %s307 = sshll.u32 [#allocation2], 4
      %s308 = int_to_ptr.vmem [resolvable:$true] %s307
      %s309 = sshll.u32 %s7, 4
      %s310 = int_to_ptr.hbm [resolvable:$true] %s309
      %312 = dma.vmem_to_hbm [thread:$0]  %s308, 256, %s310, [#allocation3]
    $region33: #{tpu_custom_call.1} parent=1 // pred_fallthru
      _
    // Predicated region
    $region34: #{tpu_custom_call.1} parent=1 // pred_check
      _
    $region35: #{tpu_custom_call.1} parent=1 // pred_check_branch
      %314 = sbr.rel (0) target = $region37
    $region36: #{tpu_custom_call.1} parent=1 // pred_region
      %316 = dma.done [#allocation3], 256
    $region37: #{tpu_custom_call.1} parent=1 // pred_fallthru
      _
    %317 = vsyncpa [#allocation3], 1

</llo_original>
